<compile_context>
chip_gen: v6e
topology: v6e:2x2x1
jax: 0.10.0
libtpu: 0.0.40
codegen_flags: <defaults>
</compile_context>

<pallas_src>
import functools

import jax
import jax.numpy as jnp
from jax.experimental import pallas as pl
from jax.experimental.pallas import tpu as pltpu

ACTIONS = [(0, 1), (0, -1), (1, 0), (-1, 0)]
IN_DIM = 2
HIDDEN = 64
OUT_DIM = len(ACTIONS)  # 4

LANE = 128
DEFAULT_TILE_B = 8192  # batch columns per grid step (multiple of 128)


def dqn_kernel(xt_ref, w1_ref, b1_ref, w2_ref, b2_ref, w3_ref, b3_ref, o_ref):
    # xt_ref: (IN_DIM, TILE_B)   -- batch on lanes
    # w1_ref: (HIDDEN, IN_DIM)   b1_ref: (HIDDEN, 1)
    # w2_ref: (HIDDEN, HIDDEN)   b2_ref: (HIDDEN, 1)
    # w3_ref: (OUT_DIM, HIDDEN)  b3_ref: (OUT_DIM, 1)
    # o_ref : (OUT_DIM, TILE_B)
    xt = xt_ref[...]
    w1 = w1_ref[...]

    # fc1 (K=2): two VPU rank-1 broadcast-FMAs instead of an MXU matmul.
    h1 = (w1[:, 0:1] * xt[0:1, :]
          + w1[:, 1:2] * xt[1:2, :]
          + b1_ref[...])
    h1 = jnp.maximum(h1, 0.0)

    # fc2 + relu (MXU, batch on lanes, default precision per review)
    h2 = jnp.dot(w2_ref[...], h1, preferred_element_type=jnp.float32) + b2_ref[...]
    h2 = jnp.maximum(h2, 0.0)

    # fc3 (no activation)
    out = jnp.dot(w3_ref[...], h2, preferred_element_type=jnp.float32) + b3_ref[...]
    o_ref[...] = out.astype(o_ref.dtype)


def _pick_tile_b(B, tile_b):
    """Lane-aligned batch tile.

    * Small batch (<= 2*LANE): one block covering the full (possibly
      unaligned) batch -- block dims equal to array dims are always legal.
    * Otherwise: largest multiple of 128 <= tile_b that still yields at least
      two grid steps (v7x has 2 TensorCores; a single giant tile would leave
      one idle).  Ragged last blocks are handled by Pallas, no padding needed.
    """
    if B <= 2 * LANE:
        return B
    half = pl.cdiv(pl.cdiv(B, 2), LANE) * LANE
    return int(min(tile_b, half))


def _dqn_pallas(xt, params, tile_b):
    """xt: (IN_DIM, B) float32 -> (OUT_DIM, B) float32. No wrapper relayouts."""
    w1, b1, w2, b2, w3, b3 = params
    B = xt.shape[1]
    tb = _pick_tile_b(B, tile_b)
    grid = (pl.cdiv(B, tb),)

    tiled = lambda shape: pl.BlockSpec(shape, lambda i: (0, i))
    resident = lambda arr: pl.BlockSpec(arr.shape, lambda i: (0, 0))

    flops = 2 * B * (IN_DIM * HIDDEN + HIDDEN * HIDDEN + HIDDEN * OUT_DIM)
    bytes_accessed = 4 * (
        B * IN_DIM + B * OUT_DIM
        + HIDDEN * IN_DIM + HIDDEN + HIDDEN * HIDDEN + HIDDEN
        + OUT_DIM * HIDDEN + OUT_DIM
    )

    return pl.pallas_call(
        dqn_kernel,
        out_shape=jax.ShapeDtypeStruct((OUT_DIM, B), jnp.float32),
        grid=grid,
        in_specs=[
            tiled((IN_DIM, tb)),
            resident(w1), resident(b1),
            resident(w2), resident(b2),
            resident(w3), resident(b3),
        ],
        out_specs=tiled((OUT_DIM, tb)),
        compiler_params=pltpu.CompilerParams(
            dimension_semantics=("parallel",),
            vmem_limit_bytes=32 << 20,
        ),
        cost_estimate=pl.CostEstimate(
            flops=flops, transcendentals=0, bytes_accessed=bytes_accessed),
    )(xt, w1, b1, w2, b2, w3, b3)


@functools.partial(jax.jit, static_argnames=("tile_b",))
def dqn_forward_t(xt, params, tile_b=DEFAULT_TILE_B):
    """Transpose-free path: xt (IN_DIM, B) -> Q-values (OUT_DIM, B)."""
    return _dqn_pallas(xt, params, tile_b)


@functools.partial(jax.jit, static_argnames=("tile_b",))
def dqn_forward(x, params, tile_b=DEFAULT_TILE_B):
    """PyTorch-semantics path: x (B, IN_DIM) -> Q-values (B, OUT_DIM)."""
    out_t = _dqn_pallas(x.T, params, tile_b)
    return out_t.T


def init_params(key):
    """Deterministic init matching PyTorch nn.Linear.

    Weights stored PyTorch-style (out_features, in_features); biases (out, 1).
    U(-1/sqrt(fan_in), 1/sqrt(fan_in)) like torch's default init.
    """
    def linear(key, fan_in, fan_out):
        kw, kb = jax.random.split(key)
        bound = 1.0 / jnp.sqrt(fan_in)
        w = jax.random.uniform(kw, (fan_out, fan_in), jnp.float32, -bound, bound)
        b = jax.random.uniform(kb, (fan_out, 1), jnp.float32, -bound, bound)
        return w, b

    k1, k2, k3 = jax.random.split(key, 3)
    w1, b1 = linear(k1, IN_DIM, HIDDEN)
    w2, b2 = linear(k2, HIDDEN, HIDDEN)
    w3, b3 = linear(k3, HIDDEN, OUT_DIM)
    return (w1, b1, w2, b2, w3, b3)


def dqn_reference(x, params):
    w1, b1, w2, b2, w3, b3 = params
    h1 = jnp.maximum(x @ w1.T + b1.T, 0.0)
    h2 = jnp.maximum(h1 @ w2.T + b2.T, 0.0)
    return h2 @ w3.T + b3.T


if __name__ == "__main__":
    key = jax.random.PRNGKey(0)
    kp, kx1, kx2 = jax.random.split(key, 3)

    params = init_params(kp)

    # Small batch of (row, col) states, matching fc1's input dim of 2.
    B = 8
    x = jax.random.uniform(kx1, (B, IN_DIM), jnp.float32, -1.0, 1.0)
    out = jax.block_until_ready(dqn_forward(x, params))
    ref = dqn_reference(x, params)
    assert out.shape == (B, OUT_DIM)
    assert jnp.allclose(out, ref, atol=1e-5, rtol=1e-5), "mismatch vs reference (B=8)"

    # Multi-tile, non-multiple-of-128 batch: exercises the >=2-step grid and
    # the ragged (masked) last block with no wrapper-side padding.
    B2 = 1300
    x2 = jax.random.uniform(kx2, (B2, IN_DIM), jnp.float32, -1.0, 1.0)
    out2 = jax.block_until_ready(dqn_forward(x2, params))
    ref2 = dqn_reference(x2, params)
    assert out2.shape == (B2, OUT_DIM)
    assert jnp.allclose(out2, ref2, atol=1e-5, rtol=1e-5), "mismatch vs reference (B=1300)"

    # Transpose-free layout path (batch on lanes end-to-end).
    out2_t = jax.block_until_ready(dqn_forward_t(x2.T, params))
    assert out2_t.shape == (OUT_DIM, B2)
    assert jnp.allclose(out2_t, ref2.T, atol=1e-5, rtol=1e-5), "mismatch vs reference (transposed path)"

    print("KERNEL_OK")
</pallas_src>

<mosaic_0001>
module attributes {stable_mosaic.version = 11 : i64} {
  func.func @dqn_kernel(%arg0: i32, %arg1: memref<2x8xf32, #tpu.memory_space<vmem>>, %arg2: memref<64x2xf32, #tpu.memory_space<vmem>>, %arg3: memref<64x1xf32, #tpu.memory_space<vmem>>, %arg4: memref<64x64xf32, #tpu.memory_space<vmem>>, %arg5: memref<64x1xf32, #tpu.memory_space<vmem>>, %arg6: memref<4x64xf32, #tpu.memory_space<vmem>>, %arg7: memref<4x1xf32, #tpu.memory_space<vmem>>, %arg8: memref<4x8xf32, #tpu.memory_space<vmem>>) attributes {dimension_semantics = [#tpu.dimension_semantics<parallel>], iteration_bounds = array<i64: 1>, scalar_prefetch = 0 : i64, scratch_operands = 0 : i64, tpu.core_type = #tpu.core_type<tc>, window_params = [{transform_indices = @transform_0, window_bounds = array<i64: 2, 8>}, {pipeline_mode = #tpu.pipeline_mode<synchronous>, transform_indices = @transform_1, window_bounds = array<i64: 64, 2>}, {pipeline_mode = #tpu.pipeline_mode<synchronous>, transform_indices = @transform_2, window_bounds = array<i64: 64, 1>}, {pipeline_mode = #tpu.pipeline_mode<synchronous>, transform_indices = @transform_3, window_bounds = array<i64: 64, 64>}, {pipeline_mode = #tpu.pipeline_mode<synchronous>, transform_indices = @transform_4, window_bounds = array<i64: 64, 1>}, {pipeline_mode = #tpu.pipeline_mode<synchronous>, transform_indices = @transform_5, window_bounds = array<i64: 4, 64>}, {pipeline_mode = #tpu.pipeline_mode<synchronous>, transform_indices = @transform_6, window_bounds = array<i64: 4, 1>}, {transform_indices = @transform_7, window_bounds = array<i64: 4, 8>}]} {
    %c0 = arith.constant 0 : index
    %c0_0 = arith.constant 0 : index
    %0 = vector.load %arg1[%c0, %c0_0] : memref<2x8xf32, #tpu.memory_space<vmem>>, vector<2x8xf32>
    %c0_1 = arith.constant 0 : index
    %c0_2 = arith.constant 0 : index
    %1 = vector.load %arg2[%c0_1, %c0_2] : memref<64x2xf32, #tpu.memory_space<vmem>>, vector<64x2xf32>
    %2 = vector.extract_strided_slice %1 {offsets = [0, 0], sizes = [64, 1], strides = [1, 1]} : vector<64x2xf32> to vector<64x1xf32>
    %3 = vector.extract_strided_slice %0 {offsets = [0, 0], sizes = [1, 8], strides = [1, 1]} : vector<2x8xf32> to vector<1x8xf32>
    %4 = vector.broadcast %2 : vector<64x1xf32> to vector<64x8xf32>
    %5 = vector.broadcast %3 : vector<1x8xf32> to vector<64x8xf32>
    %6 = arith.mulf %4, %5 : vector<64x8xf32>
    %7 = vector.extract_strided_slice %1 {offsets = [0, 1], sizes = [64, 1], strides = [1, 1]} : vector<64x2xf32> to vector<64x1xf32>
    %8 = vector.extract_strided_slice %0 {offsets = [1, 0], sizes = [1, 8], strides = [1, 1]} : vector<2x8xf32> to vector<1x8xf32>
    %9 = vector.broadcast %7 : vector<64x1xf32> to vector<64x8xf32>
    %10 = vector.broadcast %8 : vector<1x8xf32> to vector<64x8xf32>
    %11 = arith.mulf %9, %10 : vector<64x8xf32>
    %12 = arith.addf %6, %11 : vector<64x8xf32>
    %c0_3 = arith.constant 0 : index
    %c0_4 = arith.constant 0 : index
    %13 = vector.load %arg3[%c0_3, %c0_4] : memref<64x1xf32, #tpu.memory_space<vmem>>, vector<64x1xf32>
    %14 = vector.broadcast %13 : vector<64x1xf32> to vector<64x8xf32>
    %15 = arith.addf %12, %14 : vector<64x8xf32>
    %cst = arith.constant 0.000000e+00 : f32
    %16 = vector.broadcast %cst : f32 to vector<64x8xf32>
    %17 = arith.maximumf %15, %16 : vector<64x8xf32>
    %c0_5 = arith.constant 0 : index
    %c0_6 = arith.constant 0 : index
    %18 = vector.load %arg4[%c0_5, %c0_6] : memref<64x64xf32, #tpu.memory_space<vmem>>, vector<64x64xf32>
    %cst_7 = arith.constant dense<0.000000e+00> : vector<64x8xf32>
    %19 = tpu.matmul %18, %17, %cst_7 {dimension_numbers = #tpu.dot_dimension_numbers<[1], [0], [0], [1], [0, 0, 1, 1], [], []>} : vector<64x64xf32>, vector<64x8xf32>, vector<64x8xf32> -> vector<64x8xf32>
    %c0_8 = arith.constant 0 : index
    %c0_9 = arith.constant 0 : index
    %20 = vector.load %arg5[%c0_8, %c0_9] : memref<64x1xf32, #tpu.memory_space<vmem>>, vector<64x1xf32>
    %21 = vector.broadcast %20 : vector<64x1xf32> to vector<64x8xf32>
    %22 = arith.addf %19, %21 : vector<64x8xf32>
    %cst_10 = arith.constant 0.000000e+00 : f32
    %23 = vector.broadcast %cst_10 : f32 to vector<64x8xf32>
    %24 = arith.maximumf %22, %23 : vector<64x8xf32>
    %c0_11 = arith.constant 0 : index
    %c0_12 = arith.constant 0 : index
    %25 = vector.load %arg6[%c0_11, %c0_12] : memref<4x64xf32, #tpu.memory_space<vmem>>, vector<4x64xf32>
    %cst_13 = arith.constant dense<0.000000e+00> : vector<4x8xf32>
    %26 = tpu.matmul %25, %24, %cst_13 {dimension_numbers = #tpu.dot_dimension_numbers<[1], [0], [0], [1], [0, 0, 1, 1], [], []>} : vector<4x64xf32>, vector<64x8xf32>, vector<4x8xf32> -> vector<4x8xf32>
    %c0_14 = arith.constant 0 : index
    %c0_15 = arith.constant 0 : index
    %27 = vector.load %arg7[%c0_14, %c0_15] : memref<4x1xf32, #tpu.memory_space<vmem>>, vector<4x1xf32>
    %28 = vector.broadcast %27 : vector<4x1xf32> to vector<4x8xf32>
    %29 = arith.addf %26, %28 : vector<4x8xf32>
    %c0_16 = arith.constant 0 : index
    %c0_17 = arith.constant 0 : index
    %30 = vector.load %arg8[%c0_16, %c0_17] : memref<4x8xf32, #tpu.memory_space<vmem>>, vector<4x8xf32>
    tpu.vector_store %arg8[%c0_16, %c0_17], %29 {strides = array<i32>} : memref<4x8xf32, #tpu.memory_space<vmem>>, vector<4x8xf32>,
    return
  }
  func.func @transform_0(%arg0: i32) -> (i32, i32) {
    %c0_i32 = arith.constant 0 : i32
    %c0_i32_0 = arith.constant 0 : i32
    return %c0_i32, %arg0 : i32, i32
  }
  func.func @transform_1(%arg0: i32) -> (i32, i32) {
    %c0_i32 = arith.constant 0 : i32
    %c0_i32_0 = arith.constant 0 : i32
    %c0_i32_1 = arith.constant 0 : i32
    return %c0_i32, %c0_i32_0 : i32, i32
  }
  func.func @transform_2(%arg0: i32) -> (i32, i32) {
    %c0_i32 = arith.constant 0 : i32
    %c0_i32_0 = arith.constant 0 : i32
    %c0_i32_1 = arith.constant 0 : i32
    return %c0_i32, %c0_i32_0 : i32, i32
  }
  func.func @transform_3(%arg0: i32) -> (i32, i32) {
    %c0_i32 = arith.constant 0 : i32
    %c0_i32_0 = arith.constant 0 : i32
    %c0_i32_1 = arith.constant 0 : i32
    return %c0_i32, %c0_i32_0 : i32, i32
  }
  func.func @transform_4(%arg0: i32) -> (i32, i32) {
    %c0_i32 = arith.constant 0 : i32
    %c0_i32_0 = arith.constant 0 : i32
    %c0_i32_1 = arith.constant 0 : i32
    return %c0_i32, %c0_i32_0 : i32, i32
  }
  func.func @transform_5(%arg0: i32) -> (i32, i32) {
    %c0_i32 = arith.constant 0 : i32
    %c0_i32_0 = arith.constant 0 : i32
    %c0_i32_1 = arith.constant 0 : i32
    return %c0_i32, %c0_i32_0 : i32, i32
  }
  func.func @transform_6(%arg0: i32) -> (i32, i32) {
    %c0_i32 = arith.constant 0 : i32
    %c0_i32_0 = arith.constant 0 : i32
    %c0_i32_1 = arith.constant 0 : i32
    return %c0_i32, %c0_i32_0 : i32, i32
  }
  func.func @transform_7(%arg0: i32) -> (i32, i32) {
    %c0_i32 = arith.constant 0 : i32
    %c0_i32_0 = arith.constant 0 : i32
    return %c0_i32, %arg0 : i32, i32
  }
}

</mosaic_0001>

<llo_original>
// kernel: dqn_forward.1
$region0: #{dqn_forward.1}
  #allocation0 [shape = 'u32[]', space=smem, size = 0x4, offset = 0x4, fixed_abs, tag = 'smem constant byte address 0x4 - core index']
  #allocation1 [shape = 'u32[144,128]{1,0:T(1,128)}', space=vmem, size = 0x12000, scoped, tag = 'internal scratch']
  %s0 = inlined_call_operand.vmem [shape: f32[2,8], index: 0, kind: input, shape index: {}]
  %s1 = inlined_call_operand.vmem [shape: f32[64,2], index: 1, kind: input, shape index: {}]
  %s2 = inlined_call_operand.vmem [shape: f32[64,1], index: 2, kind: input, shape index: {}]
  %s3 = inlined_call_operand.vmem [shape: f32[64,64], index: 3, kind: input, shape index: {}]
  %s4 = inlined_call_operand.vmem [shape: f32[64,1], index: 4, kind: input, shape index: {}]
  %s5 = inlined_call_operand.vmem [shape: f32[4,64], index: 5, kind: input, shape index: {}]
  %s6 = inlined_call_operand.vmem [shape: f32[4,1], index: 6, kind: input, shape index: {}]
  %s7 = inlined_call_operand.hbm [shape: f32[4,8], index: 7, kind: output, shape index: {}]
  %s8 = sld [smem:[#allocation0]]
  $region38: #{dqn_forward.1} parent=0
    _
  %s10 = ssub.s32 1, %s8
  %s11 = scalar_select 0, %s10, %s8
  $region1: #{dqn_forward.1} parent=0
    #allocation2 [shape = 'u8[2048]{0}', space=vmem, size = 0x800, scoped, tag = 'output window, operand 0, single buffered']
    #allocation3 [shape = 's32[1]{0}', space=sflag, size = 0x4, scoped, tag = 'scoped memory for dqn_forward.1']
    %12 = vsyncpa [#allocation3], 0
    // Predicated region
    $region2: #{dqn_forward.1} parent=1 // pred_check
      _
    $region3: #{dqn_forward.1} parent=1 // pred_check_branch
      %14 = sbr.rel (0) target = $region5
    $region4: #{dqn_forward.1} parent=1 // pred_region
      _
    $region5: #{dqn_forward.1} parent=1 // pred_fallthru
      _
    // Predicated region
    $region6: #{dqn_forward.1} parent=1 // pred_check
      _
    $region7: #{dqn_forward.1} parent=1 // pred_check_branch
      %16 = sbr.rel (0) target = $region9
    $region8: #{dqn_forward.1} parent=1 // pred_region
      _
    $region9: #{dqn_forward.1} parent=1 // pred_fallthru
      _
    // Predicated region
    $region10: #{dqn_forward.1} parent=1 // pred_check
      _
    $region11: #{dqn_forward.1} parent=1 // pred_check_branch
      %18 = sbr.rel (0) target = $region13
    $region12: #{dqn_forward.1} parent=1 // pred_region
      _
    $region13: #{dqn_forward.1} parent=1 // pred_fallthru
      _
    // Predicated region
    $region14: #{dqn_forward.1} parent=1 // pred_check
      _
    $region15: #{dqn_forward.1} parent=1 // pred_check_branch
      %20 = sbr.rel (0) target = $region17
    $region16: #{dqn_forward.1} parent=1 // pred_region
      _
    $region17: #{dqn_forward.1} parent=1 // pred_fallthru
      _
    // Predicated region
    $region18: #{dqn_forward.1} parent=1 // pred_check
      _
    $region19: #{dqn_forward.1} parent=1 // pred_check_branch
      %22 = sbr.rel (0) target = $region21
    $region20: #{dqn_forward.1} parent=1 // pred_region
      _
    $region21: #{dqn_forward.1} parent=1 // pred_fallthru
      _
    // Predicated region
    $region22: #{dqn_forward.1} parent=1 // pred_check
      _
    $region23: #{dqn_forward.1} parent=1 // pred_check_branch
      %24 = sbr.rel (0) target = $region25
    $region24: #{dqn_forward.1} parent=1 // pred_region
      _
    $region25: #{dqn_forward.1} parent=1 // pred_fallthru
      _
    // Predicated region
    $region26: #{dqn_forward.1} parent=1 // pred_check
      _
    $region27: #{dqn_forward.1} parent=1 // pred_check_branch
      %26 = sbr.rel (0) target = $region29
    $region28: #{dqn_forward.1} parent=1 // pred_region
      _
    $region29: #{dqn_forward.1} parent=1 // pred_fallthru
      _
    %v27 = vld [vmem:[%s0] sm:$0x3]
    %v28 = vld [vmem:[%s1] sm:$0xff]
    %v29 = vld [vmem:[%s1 + $0x8] sm:$0xff]
    %v30 = vld [vmem:[%s1 + $0x10] sm:$0xff]
    %v31 = vld [vmem:[%s1 + $0x18] sm:$0xff]
    %v32 = vld [vmem:[%s1 + $0x20] sm:$0xff]
    %v33 = vld [vmem:[%s1 + $0x28] sm:$0xff]
    %v34 = vld [vmem:[%s1 + $0x30] sm:$0xff]
    %v35 = vld [vmem:[%s1 + $0x38] sm:$0xff]
    %37 = vset.pattern.permute.xlu0 0
    %38 = vperm.xlu0 %37, %v28
    %v39 = vpop.permute.xlu0 %38
    %42 = vset.pattern.permute.xlu0 0
    %43 = vperm.xlu0 %42, %v29
    %v44 = vpop.permute.xlu0 %43
    %47 = vset.pattern.permute.xlu0 0
    %48 = vperm.xlu0 %47, %v30
    %v49 = vpop.permute.xlu0 %48
    %52 = vset.pattern.permute.xlu0 0
    %53 = vperm.xlu0 %52, %v31
    %v54 = vpop.permute.xlu0 %53
    %57 = vset.pattern.permute.xlu0 0
    %58 = vperm.xlu0 %57, %v32
    %v59 = vpop.permute.xlu0 %58
    %62 = vset.pattern.permute.xlu0 0
    %63 = vperm.xlu0 %62, %v33
    %v64 = vpop.permute.xlu0 %63
    %67 = vset.pattern.permute.xlu0 0
    %68 = vperm.xlu0 %67, %v34
    %v69 = vpop.permute.xlu0 %68
    %72 = vset.pattern.permute.xlu0 0
    %73 = vperm.xlu0 %72, %v35
    %v74 = vpop.permute.xlu0 %73
    %v76 = vlaneseq
    %v77 = vshrl.u32 %v76, 7
    %v78 = vsub.s32 0, %v77
    %v79 = vrot.slane %v27, %v78
    %v80 = vmul.f32 %v39, %v79
    %v81 = vmul.f32 %v44, %v79
    %v82 = vmul.f32 %v49, %v79
    %v83 = vmul.f32 %v54, %v79
    %v84 = vmul.f32 %v59, %v79
    %v85 = vmul.f32 %v64, %v79
    %v86 = vmul.f32 %v69, %v79
    %v87 = vmul.f32 %v74, %v79
    %88 = vset.pattern.permute.xlu0 1
    %89 = vperm.xlu0 %88, %v28
    %v90 = vpop.permute.xlu0 %89
    %92 = vset.pattern.permute.xlu0 1
    %93 = vperm.xlu0 %92, %v29
    %v94 = vpop.permute.xlu0 %93
    %96 = vset.pattern.permute.xlu0 1
    %97 = vperm.xlu0 %96, %v30
    %v98 = vpop.permute.xlu0 %97
    %100 = vset.pattern.permute.xlu0 1
    %101 = vperm.xlu0 %100, %v31
    %v102 = vpop.permute.xlu0 %101
    %104 = vset.pattern.permute.xlu0 1
    %105 = vperm.xlu0 %104, %v32
    %v106 = vpop.permute.xlu0 %105
    %108 = vset.pattern.permute.xlu0 1
    %109 = vperm.xlu0 %108, %v33
    %v110 = vpop.permute.xlu0 %109
    %112 = vset.pattern.permute.xlu0 1
    %113 = vperm.xlu0 %112, %v34
    %v114 = vpop.permute.xlu0 %113
    %116 = vset.pattern.permute.xlu0 1
    %117 = vperm.xlu0 %116, %v35
    %v118 = vpop.permute.xlu0 %117
    %v120 = vlaneseq
    %v121 = vshrl.u32 %v120, 7
    %v122 = vsub.s32 1, %v121
    %v123 = vrot.slane %v27, %v122
    %v124 = vmul.f32 %v90, %v123
    %v125 = vmul.f32 %v94, %v123
    %v126 = vmul.f32 %v98, %v123
    %v127 = vmul.f32 %v102, %v123
    %v128 = vmul.f32 %v106, %v123
    %v129 = vmul.f32 %v110, %v123
    %v130 = vmul.f32 %v114, %v123
    %v131 = vmul.f32 %v118, %v123
    %v132 = vadd.f32 %v80, %v124
    %v133 = vadd.f32 %v81, %v125
    %v134 = vadd.f32 %v82, %v126
    %v135 = vadd.f32 %v83, %v127
    %v136 = vadd.f32 %v84, %v128
    %v137 = vadd.f32 %v85, %v129
    %v138 = vadd.f32 %v86, %v130
    %v139 = vadd.f32 %v87, %v131
    %v140 = vld [vmem:[%s2] sm:$0xff]
    %v141 = vld [vmem:[%s2 + $0x8] sm:$0xff]
    %v142 = vld [vmem:[%s2 + $0x10] sm:$0xff]
    %v143 = vld [vmem:[%s2 + $0x18] sm:$0xff]
    %v144 = vld [vmem:[%s2 + $0x20] sm:$0xff]
    %v145 = vld [vmem:[%s2 + $0x28] sm:$0xff]
    %v146 = vld [vmem:[%s2 + $0x30] sm:$0xff]
    %v147 = vld [vmem:[%s2 + $0x38] sm:$0xff]
    %149 = vset.pattern.permute.xlu0 0
    %150 = vperm.xlu0 %149, %v140
    %v151 = vpop.permute.xlu0 %150
    %154 = vset.pattern.permute.xlu0 0
    %155 = vperm.xlu0 %154, %v141
    %v156 = vpop.permute.xlu0 %155
    %159 = vset.pattern.permute.xlu0 0
    %160 = vperm.xlu0 %159, %v142
    %v161 = vpop.permute.xlu0 %160
    %164 = vset.pattern.permute.xlu0 0
    %165 = vperm.xlu0 %164, %v143
    %v166 = vpop.permute.xlu0 %165
    %169 = vset.pattern.permute.xlu0 0
    %170 = vperm.xlu0 %169, %v144
    %v171 = vpop.permute.xlu0 %170
    %174 = vset.pattern.permute.xlu0 0
    %175 = vperm.xlu0 %174, %v145
    %v176 = vpop.permute.xlu0 %175
    %179 = vset.pattern.permute.xlu0 0
    %180 = vperm.xlu0 %179, %v146
    %v181 = vpop.permute.xlu0 %180
    %184 = vset.pattern.permute.xlu0 0
    %185 = vperm.xlu0 %184, %v147
    %v186 = vpop.permute.xlu0 %185
    %v188 = vadd.f32 %v132, %v151
    %v189 = vadd.f32 %v133, %v156
    %v190 = vadd.f32 %v134, %v161
    %v191 = vadd.f32 %v135, %v166
    %v192 = vadd.f32 %v136, %v171
    %v193 = vadd.f32 %v137, %v176
    %v194 = vadd.f32 %v138, %v181
    %v195 = vadd.f32 %v139, %v186
    %v196 = vmax.f32 %v188, 0.0
    %v197 = vmax.f32 %v189, 0.0
    %v198 = vmax.f32 %v190, 0.0
    %v199 = vmax.f32 %v191, 0.0
    %v200 = vmax.f32 %v192, 0.0
    %v201 = vmax.f32 %v193, 0.0
    %v202 = vmax.f32 %v194, 0.0
    %v203 = vmax.f32 %v195, 0.0
    %v204 = vld [vmem:[%s3] sm:$0xff]
    %v205 = vld [vmem:[%s3 + $0x8] sm:$0xff]
    %v206 = vld [vmem:[%s3 + $0x10] sm:$0xff]
    %v207 = vld [vmem:[%s3 + $0x18] sm:$0xff]
    %v208 = vld [vmem:[%s3 + $0x20] sm:$0xff]
    %v209 = vld [vmem:[%s3 + $0x28] sm:$0xff]
    %v210 = vld [vmem:[%s3 + $0x30] sm:$0xff]
    %v211 = vld [vmem:[%s3 + $0x38] sm:$0xff]
    %v212 = vld [vmem:[%s4] sm:$0xff]
    %v213 = vld [vmem:[%s4 + $0x8] sm:$0xff]
    %v214 = vld [vmem:[%s4 + $0x10] sm:$0xff]
    %v215 = vld [vmem:[%s4 + $0x18] sm:$0xff]
    %v216 = vld [vmem:[%s4 + $0x20] sm:$0xff]
    %v217 = vld [vmem:[%s4 + $0x28] sm:$0xff]
    %v218 = vld [vmem:[%s4 + $0x30] sm:$0xff]
    %v219 = vld [vmem:[%s4 + $0x38] sm:$0xff]
    %221 = vset.pattern.permute.xlu0 0
    %222 = vperm.xlu0 %221, %v212
    %v223 = vpop.permute.xlu0 %222
    %226 = vset.pattern.permute.xlu0 0
    %227 = vperm.xlu0 %226, %v213
    %v228 = vpop.permute.xlu0 %227
    %231 = vset.pattern.permute.xlu0 0
    %232 = vperm.xlu0 %231, %v214
    %v233 = vpop.permute.xlu0 %232
    %236 = vset.pattern.permute.xlu0 0
    %237 = vperm.xlu0 %236, %v215
    %v238 = vpop.permute.xlu0 %237
    %241 = vset.pattern.permute.xlu0 0
    %242 = vperm.xlu0 %241, %v216
    %v243 = vpop.permute.xlu0 %242
    %246 = vset.pattern.permute.xlu0 0
    %247 = vperm.xlu0 %246, %v217
    %v248 = vpop.permute.xlu0 %247
    %251 = vset.pattern.permute.xlu0 0
    %252 = vperm.xlu0 %251, %v218
    %v253 = vpop.permute.xlu0 %252
    %256 = vset.pattern.permute.xlu0 0
    %257 = vperm.xlu0 %256, %v219
    %v258 = vpop.permute.xlu0 %257
    %vm260 = vcmask 523264
    %v262 = vsel %vm260, %v204, 0
    %v265 = vsel %vm260, %v205, 0
    %v268 = vsel %vm260, %v206, 0
    %v271 = vsel %vm260, %v207, 0
    %v274 = vsel %vm260, %v208, 0
    %v277 = vsel %vm260, %v209, 0
    %v280 = vsel %vm260, %v210, 0
    %v283 = vsel %vm260, %v211, 0
    %285 = vmatprep.subr.mxu0 0.0
    %286 = vmatpush1.msra.mxu0 0.0
    %287 = vmatprep.subr.mxu0 0.0
    %288 = vmatpush1.msra.mxu0 0.0
    %289 = vmatprep.subr.mxu0 0.0
    %290 = vmatpush1.msra.mxu0 0.0
    %291 = vmatprep.subr.mxu0 0.0
    %292 = vmatpush1.msra.mxu0 0.0
    %293 = vmatprep.subr.mxu0 0.0
    %294 = vmatpush1.msra.mxu0 0.0
    %295 = vmatprep.subr.mxu0 0.0
    %296 = vmatpush1.msra.mxu0 0.0
    %297 = vmatprep.subr.mxu0 0.0
    %298 = vmatpush1.msra.mxu0 0.0
    %299 = vmatprep.subr.mxu0 0.0
    %300 = vmatpush1.msra.mxu0 0.0
    %301 = vmatprep.subr.mxu0 0.0
    %302 = vmatpush1.msra.mxu0 %v203
    %303 = vmatprep.subr.mxu0 0.0
    %304 = vmatpush1.msra.mxu0 %v202
    %305 = vmatprep.subr.mxu0 0.0
    %306 = vmatpush1.msra.mxu0 %v201
    %307 = vmatprep.subr.mxu0 0.0
    %308 = vmatpush1.msra.mxu0 %v200
    %309 = vmatprep.subr.mxu0 0.0
    %310 = vmatpush1.msra.mxu0 %v199
    %311 = vmatprep.subr.mxu0 0.0
    %312 = vmatpush1.msra.mxu0 %v198
    %313 = vmatprep.subr.mxu0 0.0
    %314 = vmatpush1.msra.mxu0 %v197
    %315 = vmatprep.subr.mxu0 0.0
    %316 = vmatpush1.msra.mxu0 %v196
    %317 = vmatprep.subr.mxu0 0.0
    %318 = vmatpush2.msra.mxu0 0.0
    %319 = vmatprep.subr.mxu0 0.0
    %320 = vmatpush2.msra.mxu0 0.0
    %321 = vmatprep.subr.mxu0 0.0
    %322 = vmatpush2.msra.mxu0 0.0
    %323 = vmatprep.subr.mxu0 0.0
    %324 = vmatpush2.msra.mxu0 0.0
    %325 = vmatprep.subr.mxu0 0.0
    %326 = vmatpush2.msra.mxu0 0.0
    %327 = vmatprep.subr.mxu0 0.0
    %328 = vmatpush2.msra.mxu0 0.0
    %329 = vmatprep.subr.mxu0 0.0
    %330 = vmatpush2.msra.mxu0 0.0
    %331 = vmatprep.subr.mxu0 0.0
    %332 = vmatpush2.msra.mxu0 0.0
    %333 = vmatprep.subr.mxu0 0.0
    %334 = vmatpush2.msra.mxu0 0.0
    %335 = vmatprep.subr.mxu0 0.0
    %336 = vmatpush2.msra.mxu0 0.0
    %337 = vmatprep.subr.mxu0 0.0
    %338 = vmatpush2.msra.mxu0 0.0
    %339 = vmatprep.subr.mxu0 0.0
    %340 = vmatpush2.msra.mxu0 0.0
    %341 = vmatprep.subr.mxu0 0.0
    %342 = vmatpush2.msra.mxu0 0.0
    %343 = vmatprep.subr.mxu0 0.0
    %344 = vmatpush2.msra.mxu0 0.0
    %345 = vmatprep.subr.mxu0 0.0
    %346 = vmatpush2.msra.mxu0 0.0
    %347 = vmatprep.subr.mxu0 0.0
    %348 = vmatpush2.msra.mxu0 0.0
    %349 = vmatprep.mubr.f32.mxu0 0.0
    %350 = vmatmul.mubr.f32.gmra.mxu0 %v262
    %v351 = vpop.f32.mrf.mxu0
    %v352 = vadd.f32 %v223, %v351
    %v353 = vpop.f32.mrf.mxu0
    %354 = vmatprep.mubr.f32.mxu0 0.0
    %355 = vmatmul.mubr.f32.gmra.mxu0 %v265
    %v356 = vpop.f32.mrf.mxu0
    %v357 = vadd.f32 %v228, %v356
    %v358 = vpop.f32.mrf.mxu0
    %359 = vmatprep.mubr.f32.mxu0 0.0
    %360 = vmatmul.mubr.f32.gmra.mxu0 %v268
    %v361 = vpop.f32.mrf.mxu0
    %v362 = vadd.f32 %v233, %v361
    %v363 = vpop.f32.mrf.mxu0
    %364 = vmatprep.mubr.f32.mxu0 0.0
    %365 = vmatmul.mubr.f32.gmra.mxu0 %v271
    %v366 = vpop.f32.mrf.mxu0
    %v367 = vadd.f32 %v238, %v366
    %v368 = vpop.f32.mrf.mxu0
    %369 = vmatprep.mubr.f32.mxu0 0.0
    %370 = vmatmul.mubr.f32.gmra.mxu0 %v274
    %v371 = vpop.f32.mrf.mxu0
    %v372 = vadd.f32 %v243, %v371
    %v373 = vpop.f32.mrf.mxu0
    %374 = vmatprep.mubr.f32.mxu0 0.0
    %375 = vmatmul.mubr.f32.gmra.mxu0 %v277
    %v376 = vpop.f32.mrf.mxu0
    %v377 = vadd.f32 %v248, %v376
    %v378 = vpop.f32.mrf.mxu0
    %379 = vmatprep.mubr.f32.mxu0 0.0
    %380 = vmatmul.mubr.f32.gmra.mxu0 %v280
    %v381 = vpop.f32.mrf.mxu0
    %v382 = vadd.f32 %v253, %v381
    %v383 = vpop.f32.mrf.mxu0
    %384 = vmatprep.mubr.f32.mxu0 0.0
    %385 = vmatmul.mubr.f32.gmra.mxu0 %v283
    %v386 = vpop.f32.mrf.mxu0
    %v387 = vadd.f32 %v258, %v386
    %v388 = vpop.f32.mrf.mxu0
    %389 = vdwg.mxu0
    %v390 = vmax.f32 %v352, 0.0
    %v391 = vmax.f32 %v357, 0.0
    %v392 = vmax.f32 %v362, 0.0
    %v393 = vmax.f32 %v367, 0.0
    %v394 = vmax.f32 %v372, 0.0
    %v395 = vmax.f32 %v377, 0.0
    %v396 = vmax.f32 %v382, 0.0
    %v397 = vmax.f32 %v387, 0.0
    %v398 = vld [vmem:[%s5] sm:$0xf]
    %v399 = vld [vmem:[%s6] sm:$0xf]
    %401 = vset.pattern.permute.xlu0 0
    %402 = vperm.xlu0 %401, %v399
    %v403 = vpop.permute.xlu0 %402
    %v406 = vsel %vm260, %v398, 0
    %408 = vmatprep.subr.mxu0 0.0
    %409 = vmatpush1.msra.mxu0 0.0
    %410 = vmatprep.subr.mxu0 0.0
    %411 = vmatpush1.msra.mxu0 0.0
    %412 = vmatprep.subr.mxu0 0.0
    %413 = vmatpush1.msra.mxu0 0.0
    %414 = vmatprep.subr.mxu0 0.0
    %415 = vmatpush1.msra.mxu0 0.0
    %416 = vmatprep.subr.mxu0 0.0
    %417 = vmatpush1.msra.mxu0 0.0
    %418 = vmatprep.subr.mxu0 0.0
    %419 = vmatpush1.msra.mxu0 0.0
    %420 = vmatprep.subr.mxu0 0.0
    %421 = vmatpush1.msra.mxu0 0.0
    %422 = vmatprep.subr.mxu0 0.0
    %423 = vmatpush1.msra.mxu0 0.0
    %424 = vmatprep.subr.mxu0 0.0
    %425 = vmatpush1.msra.mxu0 %v397
    %426 = vmatprep.subr.mxu0 0.0
    %427 = vmatpush1.msra.mxu0 %v396
    %428 = vmatprep.subr.mxu0 0.0
    %429 = vmatpush1.msra.mxu0 %v395
    %430 = vmatprep.subr.mxu0 0.0
    %431 = vmatpush1.msra.mxu0 %v394
    %432 = vmatprep.subr.mxu0 0.0
    %433 = vmatpush1.msra.mxu0 %v393
    %434 = vmatprep.subr.mxu0 0.0
    %435 = vmatpush1.msra.mxu0 %v392
    %436 = vmatprep.subr.mxu0 0.0
    %437 = vmatpush1.msra.mxu0 %v391
    %438 = vmatprep.subr.mxu0 0.0
    %439 = vmatpush1.msra.mxu0 %v390
    %440 = vmatprep.subr.mxu0 0.0
    %441 = vmatpush2.msra.mxu0 0.0
    %442 = vmatprep.subr.mxu0 0.0
    %443 = vmatpush2.msra.mxu0 0.0
    %444 = vmatprep.subr.mxu0 0.0
    %445 = vmatpush2.msra.mxu0 0.0
    %446 = vmatprep.subr.mxu0 0.0
    %447 = vmatpush2.msra.mxu0 0.0
    %448 = vmatprep.subr.mxu0 0.0
    %449 = vmatpush2.msra.mxu0 0.0
    %450 = vmatprep.subr.mxu0 0.0
    %451 = vmatpush2.msra.mxu0 0.0
    %452 = vmatprep.subr.mxu0 0.0
    %453 = vmatpush2.msra.mxu0 0.0
    %454 = vmatprep.subr.mxu0 0.0
    %455 = vmatpush2.msra.mxu0 0.0
    %456 = vmatprep.subr.mxu0 0.0
    %457 = vmatpush2.msra.mxu0 0.0
    %458 = vmatprep.subr.mxu0 0.0
    %459 = vmatpush2.msra.mxu0 0.0
    %460 = vmatprep.subr.mxu0 0.0
    %461 = vmatpush2.msra.mxu0 0.0
    %462 = vmatprep.subr.mxu0 0.0
    %463 = vmatpush2.msra.mxu0 0.0
    %464 = vmatprep.subr.mxu0 0.0
    %465 = vmatpush2.msra.mxu0 0.0
    %466 = vmatprep.subr.mxu0 0.0
    %467 = vmatpush2.msra.mxu0 0.0
    %468 = vmatprep.subr.mxu0 0.0
    %469 = vmatpush2.msra.mxu0 0.0
    %470 = vmatprep.subr.mxu0 0.0
    %471 = vmatpush2.msra.mxu0 0.0
    %472 = vmatprep.mubr.f32.mxu0 0.0
    %473 = vmatmul.mubr.f32.gmra.mxu0 %v406
    %v474 = vpop.f32.mrf.mxu0
    %v475 = vadd.f32 %v403, %v474
    %v476 = vpop.f32.mrf.mxu0
    %477 = vdwg.mxu0
    %vm478 = vcmask 60416
    %479 = vst.msk [vmem:[#allocation2] sm:$0xf] %vm478, %v475
    // Predicated region
    $region30: #{dqn_forward.1} parent=1 // pred_check
      _
    $region31: #{dqn_forward.1} parent=1 // pred_check_branch
      %481 = sbr.rel (0) target = $region33
    $region32: #{dqn_forward.1} parent=1 // pred_region
      %s483 = ssub.s32 64, 64
      %484 = vsyncadd [#allocation3], %s483
      %s486 = sshll.u32 [#allocation2], 4
      %s487 = int_to_ptr.vmem [resolvable:$true] %s486
      %489 = dma.vmem_to_hbm [thread:$0]  %s487, 64, %s7, [#allocation3]
    $region33: #{dqn_forward.1} parent=1 // pred_fallthru
      _
    // Predicated region
    $region34: #{dqn_forward.1} parent=1 // pred_check
      _
    $region35: #{dqn_forward.1} parent=1 // pred_check_branch
      %491 = sbr.rel (0) target = $region37
    $region36: #{dqn_forward.1} parent=1 // pred_region
      %492 = dma.done [#allocation3], 64
    $region37: #{dqn_forward.1} parent=1 // pred_fallthru
      _
    %493 = vsyncpa [#allocation3], 1

</llo_original>
